<compile_context>
chip_gen: v7x
topology: tpu7x:2x2x1
jax: 0.10.0
libtpu: 0.0.40
codegen_flags: <defaults>
</compile_context>

<pallas_src>
import functools

import jax
import jax.numpy as jnp
import numpy as np
from jax import lax
from jax.experimental import pallas as pl
from jax.experimental.pallas import tpu as pltpu


# ---------------- helpers mirroring the PyTorch reference ----------------
def sub_filter_start_end(kernel_size, sub_kernel_size):
    center = kernel_size // 2
    dev = sub_kernel_size // 2
    return center - dev, center + dev + 1


def get_same_padding(kernel_size):
    assert kernel_size % 2 == 1, "only odd kernel sizes supported"
    return kernel_size // 2


def get_active_filter(weight, kernel_size_list, transform_mats, in_channel,
                      kernel_size):
    """JAX port of DynamicSeparableConvBn2dQuant.get_active_filter.

    weight: (max_in_channels, 1, max_ks, max_ks)  (depthwise conv weight)
    returns: (in_channel, 1, kernel_size, kernel_size)
    """
    max_ks = max(kernel_size_list)
    ks_set = sorted(set(kernel_size_list))
    start, end = sub_filter_start_end(max_ks, kernel_size)
    filters = weight[:in_channel, :, start:end, start:end]
    if kernel_size < max_ks:  # KERNEL_TRANSFORM_MODE == 1
        start_filter = weight[:in_channel, :, :, :]
        for i in range(len(ks_set) - 1, 0, -1):
            src_ks = ks_set[i]
            if src_ks <= kernel_size:
                break
            target_ks = ks_set[i - 1]
            s, e = sub_filter_start_end(src_ks, target_ks)
            _f = start_filter[:, :, s:e, s:e]
            _f = _f.reshape(-1, target_ks ** 2)
            # F.linear(x, M) == x @ M.T ; M is identity-initialized in __init__
            _f = _f @ transform_mats["%dto%d" % (src_ks, target_ks)].T
            _f = _f.reshape(in_channel, 1, target_ks, target_ks)
            start_filter = _f
        filters = start_filter
    return filters


# ---------------------------- Pallas kernel -------------------------------
def _dwconv_bn_kernel(w_ref, shift_ref, x_ref, o_ref, xpad_ref, *,
                      ks, pad, row_block):
    """One (n, c) plane of depthwise conv with BN pre-folded into the taps.

    w_ref     : SMEM (C, ks*ks)   BN-folded taps; tap index = dy*ks + dx
    shift_ref : SMEM (C,)         BN-folded additive shift
    x_ref     : VMEM (H, W)       input plane (W on the lane axis)
    o_ref     : VMEM (H, W)       output plane
    xpad_ref  : VMEM (H+2p, W+2p) scratch: zero-padded plane
    """
    c = pl.program_id(1)
    H, W = o_ref.shape

    # In-kernel "same" padding: zero the scratch, drop the plane in the middle.
    xpad_ref[...] = jnp.zeros(xpad_ref.shape, xpad_ref.dtype)
    xpad_ref[pl.ds(pad, H), pl.ds(pad, W)] = x_ref[...].astype(jnp.float32)

    # Hoist per-channel scalars (SMEM reads) out of the row loop.
    shift_c = shift_ref[c]
    taps = [w_ref[c, t] for t in range(ks * ks)]

    def compute_rows(r0, rb):
        # Row-strip accumulator keeps the live f32 value small.
        acc = jnp.full((rb, W), shift_c, dtype=jnp.float32)
        for dy in range(ks):
            for dx in range(ks):
                patch = xpad_ref[pl.ds(r0 + dy, rb), pl.ds(dx, W)]
                acc = acc + patch * taps[dy * ks + dx]
        o_ref[pl.ds(r0, rb), :] = acc.astype(o_ref.dtype)

    n_full = H // row_block

    def row_body(i, carry):
        r0 = pl.multiple_of(i * row_block, row_block)
        compute_rows(r0, row_block)
        return carry

    lax.fori_loop(0, n_full, row_body, 0)

    rem = H % row_block
    if rem:
        compute_rows(n_full * row_block, rem)


# ------------------------------ wrapper ------------------------------------
def dynamic_separable_conv_bn(x_nchw, conv_weight, transform_mats, bn_params,
                              kernel_size_list, kernel_size, *, stride=1,
                              dilation=1, eps=1e-5):
    assert stride == 1 and dilation == 1, \
        "module defaults (stride=dilation=1) supported"
    N, C, H, W = x_nchw.shape
    ks = kernel_size
    pad = get_same_padding(ks)

    # filter prep (tiny matmuls / slicing) stays in plain JAX
    filters = get_active_filter(conv_weight, kernel_size_list, transform_mats,
                                C, ks)                               # (C,1,ks,ks)

    # Fold eval-mode BatchNorm into the depthwise taps + per-channel shift.
    gamma, beta, mean, var = [p[:C].astype(jnp.float32) for p in bn_params]
    scale = gamma * jax.lax.rsqrt(var + eps)                          # (C,)
    shift = beta - mean * scale                                       # (C,)
    w_folded = (filters[:, 0, :, :].astype(jnp.float32)
                * scale[:, None, None]).reshape(C, ks * ks)           # (C, ks*ks)

    # Sublane-aligned row-strip size.
    if H >= 32:
        row_block = 32
    elif H >= 8:
        row_block = (H // 8) * 8
    else:
        row_block = H

    kernel = functools.partial(_dwconv_bn_kernel, ks=ks, pad=pad,
                               row_block=row_block)

    itemsize = jnp.dtype(x_nchw.dtype).itemsize
    cost = pl.CostEstimate(
        flops=2 * N * C * H * W * ks * ks,
        transcendentals=0,
        bytes_accessed=2 * N * C * H * W * itemsize + (w_folded.size + C) * 4)

    out = pl.pallas_call(
        kernel,
        out_shape=jax.ShapeDtypeStruct((N, C, H, W), x_nchw.dtype),
        grid=(N, C),
        in_specs=[
            pl.BlockSpec(memory_space=pltpu.MemorySpace.SMEM),   # folded taps
            pl.BlockSpec(memory_space=pltpu.MemorySpace.SMEM),   # folded shift
            pl.BlockSpec((None, None, H, W), lambda n, c: (n, c, 0, 0)),
        ],
        out_specs=pl.BlockSpec((None, None, H, W), lambda n, c: (n, c, 0, 0)),
        scratch_shapes=[pltpu.VMEM((H + 2 * pad, W + 2 * pad), jnp.float32)],
        compiler_params=pltpu.CompilerParams(
            dimension_semantics=("parallel", "parallel")),
        cost_estimate=cost,
    )(w_folded, shift, x_nchw)
    return out


# -------------------------------- main --------------------------------------
if __name__ == "__main__":
    key = jax.random.PRNGKey(0)
    kernel_size_list = [3, 5, 7]
    max_in_channels = 4
    N, C, H, W = 2, 4, 16, 16
    active_kernel_size = 5          # exercises the 7->5 kernel transform path
    eps = 1e-5

    k1, k2, k3, k4, k5, k6 = jax.random.split(key, 6)
    max_ks = max(kernel_size_list)
    conv_weight = 0.1 * jax.random.normal(
        k1, (max_in_channels, 1, max_ks, max_ks), jnp.float32)

    # NtoM transform matrices are torch.eye-initialized in __init__
    ks_set = sorted(set(kernel_size_list))
    transform_mats = {}
    for i in range(len(ks_set) - 1):
        ks_small, ks_larger = ks_set[i], ks_set[i + 1]
        transform_mats["%dto%d" % (ks_larger, ks_small)] = jnp.eye(
            ks_small ** 2, dtype=jnp.float32)

    gamma = jax.random.uniform(k2, (max_in_channels,), jnp.float32, 0.5, 1.5)
    beta = 0.1 * jax.random.normal(k3, (max_in_channels,), jnp.float32)
    running_mean = 0.1 * jax.random.normal(k4, (max_in_channels,), jnp.float32)
    running_var = jax.random.uniform(k5, (max_in_channels,), jnp.float32, 0.5, 1.5)
    x = jax.random.normal(k6, (N, C, H, W), jnp.float32)

    out = dynamic_separable_conv_bn(
        x, conv_weight, transform_mats,
        (gamma, beta, running_mean, running_var),
        kernel_size_list, active_kernel_size, eps=eps)
    out = jax.block_until_ready(out)

    # pure-JAX reference (depthwise conv + eval-mode BN)
    filters_ref = get_active_filter(conv_weight, kernel_size_list,
                                    transform_mats, C, active_kernel_size)
    pad = get_same_padding(active_kernel_size)
    ref_conv = jax.lax.conv_general_dilated(
        x, filters_ref, window_strides=(1, 1),
        padding=[(pad, pad), (pad, pad)],
        dimension_numbers=("NCHW", "OIHW", "NCHW"),
        feature_group_count=C)
    scale = gamma * jax.lax.rsqrt(running_var + eps)
    ref = (ref_conv * scale[None, :, None, None]
           + (beta - running_mean * scale)[None, :, None, None])

    np.testing.assert_allclose(np.asarray(out), np.asarray(ref),
                               rtol=1e-4, atol=1e-4)
    print("KERNEL_OK")
</pallas_src>

<mosaic_0001>
module attributes {stable_mosaic.version = 11 : i64} {
  func.func @_dwconv_bn_kernel(%arg0: i32, %arg1: i32, %arg2: memref<4x25xf32, #tpu.memory_space<smem>>, %arg3: memref<4xf32, #tpu.memory_space<smem>>, %arg4: memref<1x1x16x16xf32, #tpu.memory_space<vmem>>, %arg5: memref<1x1x16x16xf32, #tpu.memory_space<vmem>>, %arg6: memref<20x20xf32, #tpu.memory_space<vmem>>) attributes {dimension_semantics = [#tpu.dimension_semantics<parallel>, #tpu.dimension_semantics<parallel>], iteration_bounds = array<i64: 2, 4>, scalar_prefetch = 0 : i64, scratch_operands = 1 : i64, tpu.core_type = #tpu.core_type<tc>, window_params = [{transform_indices = @transform_0, window_bounds = array<i64: 4, 25>}, {transform_indices = @transform_1, window_bounds = array<i64: 4>}, {transform_indices = @transform_2, window_bounds = array<i64: 1, 1, 16, 16>}, {transform_indices = @transform_3, window_bounds = array<i64: 1, 1, 16, 16>}]} {
    %cst = arith.constant 0.000000e+00 : f32
    %0 = vector.broadcast %cst : f32 to vector<20x20xf32>
    %c0 = arith.constant 0 : index
    %c0_0 = arith.constant 0 : index
    %1 = vector.load %arg6[%c0, %c0_0] : memref<20x20xf32, #tpu.memory_space<vmem>>, vector<20x20xf32>
    tpu.vector_store %arg6[%c0, %c0_0], %0 {strides = array<i32>} : memref<20x20xf32, #tpu.memory_space<vmem>>, vector<20x20xf32>,
    %c0_1 = arith.constant 0 : index
    %c0_2 = arith.constant 0 : index
    %c0_3 = arith.constant 0 : index
    %c0_4 = arith.constant 0 : index
    %2 = vector.load %arg4[%c0_1, %c0_2, %c0_3, %c0_4] : memref<1x1x16x16xf32, #tpu.memory_space<vmem>>, vector<1x1x16x16xf32>
    %3 = vector.shape_cast %2 : vector<1x1x16x16xf32> to vector<16x16xf32>
    %c2 = arith.constant 2 : index
    %c2_5 = arith.constant 2 : index
    %4 = vector.load %arg6[%c2, %c2_5] : memref<20x20xf32, #tpu.memory_space<vmem>>, vector<16x16xf32>
    tpu.vector_store %arg6[%c2, %c2_5], %3 {strides = array<i32>} : memref<20x20xf32, #tpu.memory_space<vmem>>, vector<16x16xf32>,
    %5 = arith.index_cast %arg1 : i32 to index
    %6 = memref.load %arg3[%5] : memref<4xf32, #tpu.memory_space<smem>>
    %7 = arith.index_cast %arg1 : i32 to index
    %c0_6 = arith.constant 0 : index
    %8 = memref.load %arg2[%7, %c0_6] : memref<4x25xf32, #tpu.memory_space<smem>>
    %9 = arith.index_cast %arg1 : i32 to index
    %c1 = arith.constant 1 : index
    %10 = memref.load %arg2[%9, %c1] : memref<4x25xf32, #tpu.memory_space<smem>>
    %11 = arith.index_cast %arg1 : i32 to index
    %c2_7 = arith.constant 2 : index
    %12 = memref.load %arg2[%11, %c2_7] : memref<4x25xf32, #tpu.memory_space<smem>>
    %13 = arith.index_cast %arg1 : i32 to index
    %c3 = arith.constant 3 : index
    %14 = memref.load %arg2[%13, %c3] : memref<4x25xf32, #tpu.memory_space<smem>>
    %15 = arith.index_cast %arg1 : i32 to index
    %c4 = arith.constant 4 : index
    %16 = memref.load %arg2[%15, %c4] : memref<4x25xf32, #tpu.memory_space<smem>>
    %17 = arith.index_cast %arg1 : i32 to index
    %c5 = arith.constant 5 : index
    %18 = memref.load %arg2[%17, %c5] : memref<4x25xf32, #tpu.memory_space<smem>>
    %19 = arith.index_cast %arg1 : i32 to index
    %c6 = arith.constant 6 : index
    %20 = memref.load %arg2[%19, %c6] : memref<4x25xf32, #tpu.memory_space<smem>>
    %21 = arith.index_cast %arg1 : i32 to index
    %c7 = arith.constant 7 : index
    %22 = memref.load %arg2[%21, %c7] : memref<4x25xf32, #tpu.memory_space<smem>>
    %23 = arith.index_cast %arg1 : i32 to index
    %c8 = arith.constant 8 : index
    %24 = memref.load %arg2[%23, %c8] : memref<4x25xf32, #tpu.memory_space<smem>>
    %25 = arith.index_cast %arg1 : i32 to index
    %c9 = arith.constant 9 : index
    %26 = memref.load %arg2[%25, %c9] : memref<4x25xf32, #tpu.memory_space<smem>>
    %27 = arith.index_cast %arg1 : i32 to index
    %c10 = arith.constant 10 : index
    %28 = memref.load %arg2[%27, %c10] : memref<4x25xf32, #tpu.memory_space<smem>>
    %29 = arith.index_cast %arg1 : i32 to index
    %c11 = arith.constant 11 : index
    %30 = memref.load %arg2[%29, %c11] : memref<4x25xf32, #tpu.memory_space<smem>>
    %31 = arith.index_cast %arg1 : i32 to index
    %c12 = arith.constant 12 : index
    %32 = memref.load %arg2[%31, %c12] : memref<4x25xf32, #tpu.memory_space<smem>>
    %33 = arith.index_cast %arg1 : i32 to index
    %c13 = arith.constant 13 : index
    %34 = memref.load %arg2[%33, %c13] : memref<4x25xf32, #tpu.memory_space<smem>>
    %35 = arith.index_cast %arg1 : i32 to index
    %c14 = arith.constant 14 : index
    %36 = memref.load %arg2[%35, %c14] : memref<4x25xf32, #tpu.memory_space<smem>>
    %37 = arith.index_cast %arg1 : i32 to index
    %c15 = arith.constant 15 : index
    %38 = memref.load %arg2[%37, %c15] : memref<4x25xf32, #tpu.memory_space<smem>>
    %39 = arith.index_cast %arg1 : i32 to index
    %c16 = arith.constant 16 : index
    %40 = memref.load %arg2[%39, %c16] : memref<4x25xf32, #tpu.memory_space<smem>>
    %41 = arith.index_cast %arg1 : i32 to index
    %c17 = arith.constant 17 : index
    %42 = memref.load %arg2[%41, %c17] : memref<4x25xf32, #tpu.memory_space<smem>>
    %43 = arith.index_cast %arg1 : i32 to index
    %c18 = arith.constant 18 : index
    %44 = memref.load %arg2[%43, %c18] : memref<4x25xf32, #tpu.memory_space<smem>>
    %45 = arith.index_cast %arg1 : i32 to index
    %c19 = arith.constant 19 : index
    %46 = memref.load %arg2[%45, %c19] : memref<4x25xf32, #tpu.memory_space<smem>>
    %47 = arith.index_cast %arg1 : i32 to index
    %c20 = arith.constant 20 : index
    %48 = memref.load %arg2[%47, %c20] : memref<4x25xf32, #tpu.memory_space<smem>>
    %49 = arith.index_cast %arg1 : i32 to index
    %c21 = arith.constant 21 : index
    %50 = memref.load %arg2[%49, %c21] : memref<4x25xf32, #tpu.memory_space<smem>>
    %51 = arith.index_cast %arg1 : i32 to index
    %c22 = arith.constant 22 : index
    %52 = memref.load %arg2[%51, %c22] : memref<4x25xf32, #tpu.memory_space<smem>>
    %53 = arith.index_cast %arg1 : i32 to index
    %c23 = arith.constant 23 : index
    %54 = memref.load %arg2[%53, %c23] : memref<4x25xf32, #tpu.memory_space<smem>>
    %55 = arith.index_cast %arg1 : i32 to index
    %c24 = arith.constant 24 : index
    %56 = memref.load %arg2[%55, %c24] : memref<4x25xf32, #tpu.memory_space<smem>>
    %c0_i32 = arith.constant 0 : i32
    %c16_i32 = arith.constant 16 : i32
    %57 = arith.muli %c0_i32, %c16_i32 : i32
    %58 = tpu.assume_multiple %57, 16 : i32
    %59 = vector.broadcast %6 : f32 to vector<16x16xf32>
    %c0_i32_8 = arith.constant 0 : i32
    %60 = arith.addi %58, %c0_i32_8 : i32
    %61 = arith.index_cast %60 : i32 to index
    %c0_9 = arith.constant 0 : index
    %62 = vector.load %arg6[%61, %c0_9] : memref<20x20xf32, #tpu.memory_space<vmem>>, vector<16x16xf32>
    %63 = vector.broadcast %8 : f32 to vector<16x16xf32>
    %64 = arith.mulf %62, %63 : vector<16x16xf32>
    %65 = arith.addf %59, %64 : vector<16x16xf32>
    %c0_i32_10 = arith.constant 0 : i32
    %66 = arith.addi %58, %c0_i32_10 : i32
    %67 = arith.index_cast %66 : i32 to index
    %c1_11 = arith.constant 1 : index
    %68 = vector.load %arg6[%67, %c1_11] : memref<20x20xf32, #tpu.memory_space<vmem>>, vector<16x16xf32>
    %69 = vector.broadcast %10 : f32 to vector<16x16xf32>
    %70 = arith.mulf %68, %69 : vector<16x16xf32>
    %71 = arith.addf %65, %70 : vector<16x16xf32>
    %c0_i32_12 = arith.constant 0 : i32
    %72 = arith.addi %58, %c0_i32_12 : i32
    %73 = arith.index_cast %72 : i32 to index
    %c2_13 = arith.constant 2 : index
    %74 = vector.load %arg6[%73, %c2_13] : memref<20x20xf32, #tpu.memory_space<vmem>>, vector<16x16xf32>
    %75 = vector.broadcast %12 : f32 to vector<16x16xf32>
    %76 = arith.mulf %74, %75 : vector<16x16xf32>
    %77 = arith.addf %71, %76 : vector<16x16xf32>
    %c0_i32_14 = arith.constant 0 : i32
    %78 = arith.addi %58, %c0_i32_14 : i32
    %79 = arith.index_cast %78 : i32 to index
    %c3_15 = arith.constant 3 : index
    %80 = vector.load %arg6[%79, %c3_15] : memref<20x20xf32, #tpu.memory_space<vmem>>, vector<16x16xf32>
    %81 = vector.broadcast %14 : f32 to vector<16x16xf32>
    %82 = arith.mulf %80, %81 : vector<16x16xf32>
    %83 = arith.addf %77, %82 : vector<16x16xf32>
    %c0_i32_16 = arith.constant 0 : i32
    %84 = arith.addi %58, %c0_i32_16 : i32
    %85 = arith.index_cast %84 : i32 to index
    %c4_17 = arith.constant 4 : index
    %86 = vector.load %arg6[%85, %c4_17] : memref<20x20xf32, #tpu.memory_space<vmem>>, vector<16x16xf32>
    %87 = vector.broadcast %16 : f32 to vector<16x16xf32>
    %88 = arith.mulf %86, %87 : vector<16x16xf32>
    %89 = arith.addf %83, %88 : vector<16x16xf32>
    %c1_i32 = arith.constant 1 : i32
    %90 = arith.addi %58, %c1_i32 : i32
    %91 = arith.index_cast %90 : i32 to index
    %c0_18 = arith.constant 0 : index
    %92 = vector.load %arg6[%91, %c0_18] : memref<20x20xf32, #tpu.memory_space<vmem>>, vector<16x16xf32>
    %93 = vector.broadcast %18 : f32 to vector<16x16xf32>
    %94 = arith.mulf %92, %93 : vector<16x16xf32>
    %95 = arith.addf %89, %94 : vector<16x16xf32>
    %c1_i32_19 = arith.constant 1 : i32
    %96 = arith.addi %58, %c1_i32_19 : i32
    %97 = arith.index_cast %96 : i32 to index
    %c1_20 = arith.constant 1 : index
    %98 = vector.load %arg6[%97, %c1_20] : memref<20x20xf32, #tpu.memory_space<vmem>>, vector<16x16xf32>
    %99 = vector.broadcast %20 : f32 to vector<16x16xf32>
    %100 = arith.mulf %98, %99 : vector<16x16xf32>
    %101 = arith.addf %95, %100 : vector<16x16xf32>
    %c1_i32_21 = arith.constant 1 : i32
    %102 = arith.addi %58, %c1_i32_21 : i32
    %103 = arith.index_cast %102 : i32 to index
    %c2_22 = arith.constant 2 : index
    %104 = vector.load %arg6[%103, %c2_22] : memref<20x20xf32, #tpu.memory_space<vmem>>, vector<16x16xf32>
    %105 = vector.broadcast %22 : f32 to vector<16x16xf32>
    %106 = arith.mulf %104, %105 : vector<16x16xf32>
    %107 = arith.addf %101, %106 : vector<16x16xf32>
    %c1_i32_23 = arith.constant 1 : i32
    %108 = arith.addi %58, %c1_i32_23 : i32
    %109 = arith.index_cast %108 : i32 to index
    %c3_24 = arith.constant 3 : index
    %110 = vector.load %arg6[%109, %c3_24] : memref<20x20xf32, #tpu.memory_space<vmem>>, vector<16x16xf32>
    %111 = vector.broadcast %24 : f32 to vector<16x16xf32>
    %112 = arith.mulf %110, %111 : vector<16x16xf32>
    %113 = arith.addf %107, %112 : vector<16x16xf32>
    %c1_i32_25 = arith.constant 1 : i32
    %114 = arith.addi %58, %c1_i32_25 : i32
    %115 = arith.index_cast %114 : i32 to index
    %c4_26 = arith.constant 4 : index
    %116 = vector.load %arg6[%115, %c4_26] : memref<20x20xf32, #tpu.memory_space<vmem>>, vector<16x16xf32>
    %117 = vector.broadcast %26 : f32 to vector<16x16xf32>
    %118 = arith.mulf %116, %117 : vector<16x16xf32>
    %119 = arith.addf %113, %118 : vector<16x16xf32>
    %c2_i32 = arith.constant 2 : i32
    %120 = arith.addi %58, %c2_i32 : i32
    %121 = arith.index_cast %120 : i32 to index
    %c0_27 = arith.constant 0 : index
    %122 = vector.load %arg6[%121, %c0_27] : memref<20x20xf32, #tpu.memory_space<vmem>>, vector<16x16xf32>
    %123 = vector.broadcast %28 : f32 to vector<16x16xf32>
    %124 = arith.mulf %122, %123 : vector<16x16xf32>
    %125 = arith.addf %119, %124 : vector<16x16xf32>
    %c2_i32_28 = arith.constant 2 : i32
    %126 = arith.addi %58, %c2_i32_28 : i32
    %127 = arith.index_cast %126 : i32 to index
    %c1_29 = arith.constant 1 : index
    %128 = vector.load %arg6[%127, %c1_29] : memref<20x20xf32, #tpu.memory_space<vmem>>, vector<16x16xf32>
    %129 = vector.broadcast %30 : f32 to vector<16x16xf32>
    %130 = arith.mulf %128, %129 : vector<16x16xf32>
    %131 = arith.addf %125, %130 : vector<16x16xf32>
    %c2_i32_30 = arith.constant 2 : i32
    %132 = arith.addi %58, %c2_i32_30 : i32
    %133 = arith.index_cast %132 : i32 to index
    %c2_31 = arith.constant 2 : index
    %134 = vector.load %arg6[%133, %c2_31] : memref<20x20xf32, #tpu.memory_space<vmem>>, vector<16x16xf32>
    %135 = vector.broadcast %32 : f32 to vector<16x16xf32>
    %136 = arith.mulf %134, %135 : vector<16x16xf32>
    %137 = arith.addf %131, %136 : vector<16x16xf32>
    %c2_i32_32 = arith.constant 2 : i32
    %138 = arith.addi %58, %c2_i32_32 : i32
    %139 = arith.index_cast %138 : i32 to index
    %c3_33 = arith.constant 3 : index
    %140 = vector.load %arg6[%139, %c3_33] : memref<20x20xf32, #tpu.memory_space<vmem>>, vector<16x16xf32>
    %141 = vector.broadcast %34 : f32 to vector<16x16xf32>
    %142 = arith.mulf %140, %141 : vector<16x16xf32>
    %143 = arith.addf %137, %142 : vector<16x16xf32>
    %c2_i32_34 = arith.constant 2 : i32
    %144 = arith.addi %58, %c2_i32_34 : i32
    %145 = arith.index_cast %144 : i32 to index
    %c4_35 = arith.constant 4 : index
    %146 = vector.load %arg6[%145, %c4_35] : memref<20x20xf32, #tpu.memory_space<vmem>>, vector<16x16xf32>
    %147 = vector.broadcast %36 : f32 to vector<16x16xf32>
    %148 = arith.mulf %146, %147 : vector<16x16xf32>
    %149 = arith.addf %143, %148 : vector<16x16xf32>
    %c3_i32 = arith.constant 3 : i32
    %150 = arith.addi %58, %c3_i32 : i32
    %151 = arith.index_cast %150 : i32 to index
    %c0_36 = arith.constant 0 : index
    %152 = vector.load %arg6[%151, %c0_36] : memref<20x20xf32, #tpu.memory_space<vmem>>, vector<16x16xf32>
    %153 = vector.broadcast %38 : f32 to vector<16x16xf32>
    %154 = arith.mulf %152, %153 : vector<16x16xf32>
    %155 = arith.addf %149, %154 : vector<16x16xf32>
    %c3_i32_37 = arith.constant 3 : i32
    %156 = arith.addi %58, %c3_i32_37 : i32
    %157 = arith.index_cast %156 : i32 to index
    %c1_38 = arith.constant 1 : index
    %158 = vector.load %arg6[%157, %c1_38] : memref<20x20xf32, #tpu.memory_space<vmem>>, vector<16x16xf32>
    %159 = vector.broadcast %40 : f32 to vector<16x16xf32>
    %160 = arith.mulf %158, %159 : vector<16x16xf32>
    %161 = arith.addf %155, %160 : vector<16x16xf32>
    %c3_i32_39 = arith.constant 3 : i32
    %162 = arith.addi %58, %c3_i32_39 : i32
    %163 = arith.index_cast %162 : i32 to index
    %c2_40 = arith.constant 2 : index
    %164 = vector.load %arg6[%163, %c2_40] : memref<20x20xf32, #tpu.memory_space<vmem>>, vector<16x16xf32>
    %165 = vector.broadcast %42 : f32 to vector<16x16xf32>
    %166 = arith.mulf %164, %165 : vector<16x16xf32>
    %167 = arith.addf %161, %166 : vector<16x16xf32>
    %c3_i32_41 = arith.constant 3 : i32
    %168 = arith.addi %58, %c3_i32_41 : i32
    %169 = arith.index_cast %168 : i32 to index
    %c3_42 = arith.constant 3 : index
    %170 = vector.load %arg6[%169, %c3_42] : memref<20x20xf32, #tpu.memory_space<vmem>>, vector<16x16xf32>
    %171 = vector.broadcast %44 : f32 to vector<16x16xf32>
    %172 = arith.mulf %170, %171 : vector<16x16xf32>
    %173 = arith.addf %167, %172 : vector<16x16xf32>
    %c3_i32_43 = arith.constant 3 : i32
    %174 = arith.addi %58, %c3_i32_43 : i32
    %175 = arith.index_cast %174 : i32 to index
    %c4_44 = arith.constant 4 : index
    %176 = vector.load %arg6[%175, %c4_44] : memref<20x20xf32, #tpu.memory_space<vmem>>, vector<16x16xf32>
    %177 = vector.broadcast %46 : f32 to vector<16x16xf32>
    %178 = arith.mulf %176, %177 : vector<16x16xf32>
    %179 = arith.addf %173, %178 : vector<16x16xf32>
    %c4_i32 = arith.constant 4 : i32
    %180 = arith.addi %58, %c4_i32 : i32
    %181 = arith.index_cast %180 : i32 to index
    %c0_45 = arith.constant 0 : index
    %182 = vector.load %arg6[%181, %c0_45] : memref<20x20xf32, #tpu.memory_space<vmem>>, vector<16x16xf32>
    %183 = vector.broadcast %48 : f32 to vector<16x16xf32>
    %184 = arith.mulf %182, %183 : vector<16x16xf32>
    %185 = arith.addf %179, %184 : vector<16x16xf32>
    %c4_i32_46 = arith.constant 4 : i32
    %186 = arith.addi %58, %c4_i32_46 : i32
    %187 = arith.index_cast %186 : i32 to index
    %c1_47 = arith.constant 1 : index
    %188 = vector.load %arg6[%187, %c1_47] : memref<20x20xf32, #tpu.memory_space<vmem>>, vector<16x16xf32>
    %189 = vector.broadcast %50 : f32 to vector<16x16xf32>
    %190 = arith.mulf %188, %189 : vector<16x16xf32>
    %191 = arith.addf %185, %190 : vector<16x16xf32>
    %c4_i32_48 = arith.constant 4 : i32
    %192 = arith.addi %58, %c4_i32_48 : i32
    %193 = arith.index_cast %192 : i32 to index
    %c2_49 = arith.constant 2 : index
    %194 = vector.load %arg6[%193, %c2_49] : memref<20x20xf32, #tpu.memory_space<vmem>>, vector<16x16xf32>
    %195 = vector.broadcast %52 : f32 to vector<16x16xf32>
    %196 = arith.mulf %194, %195 : vector<16x16xf32>
    %197 = arith.addf %191, %196 : vector<16x16xf32>
    %c4_i32_50 = arith.constant 4 : i32
    %198 = arith.addi %58, %c4_i32_50 : i32
    %199 = arith.index_cast %198 : i32 to index
    %c3_51 = arith.constant 3 : index
    %200 = vector.load %arg6[%199, %c3_51] : memref<20x20xf32, #tpu.memory_space<vmem>>, vector<16x16xf32>
    %201 = vector.broadcast %54 : f32 to vector<16x16xf32>
    %202 = arith.mulf %200, %201 : vector<16x16xf32>
    %203 = arith.addf %197, %202 : vector<16x16xf32>
    %c4_i32_52 = arith.constant 4 : i32
    %204 = arith.addi %58, %c4_i32_52 : i32
    %205 = arith.index_cast %204 : i32 to index
    %c4_53 = arith.constant 4 : index
    %206 = vector.load %arg6[%205, %c4_53] : memref<20x20xf32, #tpu.memory_space<vmem>>, vector<16x16xf32>
    %207 = vector.broadcast %56 : f32 to vector<16x16xf32>
    %208 = arith.mulf %206, %207 : vector<16x16xf32>
    %209 = arith.addf %203, %208 : vector<16x16xf32>
    %c0_54 = arith.constant 0 : index
    %c0_55 = arith.constant 0 : index
    %210 = arith.index_cast %58 : i32 to index
    %c0_56 = arith.constant 0 : index
    %211 = vector.load %arg5[%c0_54, %c0_55, %210, %c0_56] : memref<1x1x16x16xf32, #tpu.memory_space<vmem>>, vector<1x1x16x16xf32>
    %212 = vector.shape_cast %211 : vector<1x1x16x16xf32> to vector<16x16xf32>
    %213 = vector.shape_cast %209 : vector<16x16xf32> to vector<1x1x16x16xf32>
    tpu.vector_store %arg5[%c0_54, %c0_55, %210, %c0_56], %213 {strides = array<i32>} : memref<1x1x16x16xf32, #tpu.memory_space<vmem>>, vector<1x1x16x16xf32>,
    %c1_i32_57 = arith.constant 1 : i32
    return
  }
  func.func @transform_0(%arg0: i32, %arg1: i32) -> (i32, i32) {
    %c0_i32 = arith.constant 0 : i32
    %c0_i32_0 = arith.constant 0 : i32
    %c0_i32_1 = arith.constant 0 : i32
    return %c0_i32, %c0_i32_0 : i32, i32
  }
  func.func @transform_1(%arg0: i32, %arg1: i32) -> i32 {
    %c0_i32 = arith.constant 0 : i32
    %c0_i32_0 = arith.constant 0 : i32
    return %c0_i32 : i32
  }
  func.func @transform_2(%arg0: i32, %arg1: i32) -> (i32, i32, i32, i32) {
    %c0_i32 = arith.constant 0 : i32
    %c0_i32_0 = arith.constant 0 : i32
    %c0_i32_1 = arith.constant 0 : i32
    return %arg0, %arg1, %c0_i32, %c0_i32_0 : i32, i32, i32, i32
  }
  func.func @transform_3(%arg0: i32, %arg1: i32) -> (i32, i32, i32, i32) {
    %c0_i32 = arith.constant 0 : i32
    %c0_i32_0 = arith.constant 0 : i32
    %c0_i32_1 = arith.constant 0 : i32
    return %arg0, %arg1, %c0_i32, %c0_i32_0 : i32, i32, i32, i32
  }
}

</mosaic_0001>

<llo_original>
// kernel: tpu_custom_call.1
$region0: #{tpu_custom_call.1}
  #allocation0 [shape = 'u32[]', space=smem, size = 0x4, offset = 0x4, fixed_abs, tag = 'smem constant byte address 0x4 - core index']
  #allocation1 [shape = 'u32[144,128]{1,0:T(1,128)}', space=vmem, size = 0x12000, scoped, tag = 'internal scratch']
  #allocation2 [shape = 'f32[20,20]{1,0:T(8,128)}', space=vmem, size = 0x3000, scoped, tag = 'scratch operand']
  %s0 = inlined_call_operand.hbm [shape: f32[4,25], index: 0, kind: input, shape index: {}]
  %s1 = inlined_call_operand.vmem [shape: f32[4], index: 1, kind: input, shape index: {}]
  %s2 = inlined_call_operand.hbm [shape: f32[2,4,16,16], index: 2, kind: input, shape index: {}]
  %s3 = inlined_call_operand.hbm [shape: f32[2,4,16,16], index: 3, kind: output, shape index: {}]
  %s4 = sld [smem:[#allocation0]]
  $region57: #{tpu_custom_call.1} parent=0
    _
  %s6 = ssub.s32 1, %s4
  %s7 = scalar_select 0, %s6, %s4
  $region1: #{tpu_custom_call.1} parent=0
    #allocation3 [shape = 'u8[2048]{0}', space=smem, size = 0x800, scoped, tag = 'input window, operand 0, single buffered']
    #allocation4 [shape = 's32[2]{0}', space=sflag, size = 0x8, scoped, tag = 'scoped memory for tpu_custom_call.1']
    #allocation5 [shape = 's32[2]{0}', space=sflag, size = 0x8, scoped, tag = 'scoped memory for tpu_custom_call.1']
    #allocation6 [shape = 's32[2]{0}', space=sflag, size = 0x8, scoped, tag = 'scoped memory for tpu_custom_call.1']
    #allocation7 [shape = 's32[2]{0}', space=sflag, size = 0x8, scoped, tag = 'scoped memory for tpu_custom_call.1']
    #allocation8 [shape = 'u8[512]{0}', space=smem, size = 0x200, scoped, tag = 'input window, operand 1, single buffered']
    #allocation9 [shape = 'u8[16384]{0}', space=vmem, size = 0x4000, scoped, tag = 'input window, operand 2']
    #allocation10 [shape = 'u8[16384]{0}', space=vmem, size = 0x4000, scoped, tag = 'output window, operand 0']
    %8 = vsyncpa [#allocation6], 0
    %9 = vsyncpa [#allocation7], 0
    %10 = vsyncpa [#allocation4], 0
    %s11 = scalar_lea.sflag [#allocation4], 1
    %12 = vsyncpa %s11, 0
    %13 = vsyncpa [#allocation5], 0
    %s14 = scalar_lea.sflag [#allocation5], 1
    %15 = vsyncpa %s14, 0
    loop: start=0, step=1, limit=10
    $region2: #{tpu_custom_call.1} parent=1 // loop_pre_header
      _
    $region3: #{tpu_custom_call.1} parent=1 // loop_header
      %s17 = sphi 0, %s21
      %p18 = scmp.ge.s32.totalorder %s17, 10
      %s24 = sphi 0, %s36
      %s25 = sphi 0, %s32
      %s26 = sphi 0, %s24
      %s27 = sphi 0, %s25
      %s28 = sphi 0, %s26
      %s29 = sphi 0, %s27
      %s37 = sphi 0, %s37
      %s39 = sphi 0, %s37
      %s40 = sphi 0, %s39
      %s54 = sphi 0, %s40
      %s58 = sphi 0, %s58
      %s60 = sphi 0, %s58
      %s61 = sphi 0, %s60
      %s75 = sphi 0, %s61
      %s83 = sphi 0, %s85
      %s86 = sphi 0, %s83
      %s87 = sphi 0, %s86
      %s103 = sphi 0, %s87
      %s111 = sphi 0, %s113
      %s114 = sphi 0, %s111
      %s115 = sphi 0, %s114
      %s131 = sphi 0, %s115
    $region4: #{tpu_custom_call.1} parent=1 // loop_header_branch
      %20 = sbr.rel (%p18) target = $region8
    $region5: #{tpu_custom_call.1} parent=1 // loop_body
      %s22 = ssub.s32 %s17, 1
      %s23 = ssub.s32 %s17, 2
      %s30 = sadd.s32 1, %s25
      %p31 = scmp.ge.s32.totalorder %s30, 4
      %s32 = scalar_select %p31, 0, %s30
      %s33 = sadd.s32 1, %s24
      %s34 = scalar_select %p31, %s33, %s24
      %p35 = scmp.ge.s32.totalorder %s34, 2
      %s36 = scalar_select %p35, 0, %s34
      %s38 = sadd.s32 %s37, 1
      %p41 = scmp.eq.s32.totalorder %s17, 7
      %p42 = scmp.ne.s32.totalorder %s37, %s39
      %p43 = scmp.eq.s32.totalorder %s17, 0
      %p44 = por %p42, %p43
      %p45 = scmp.ne.s32.totalorder %s37, %s39
      %p46 = scmp.eq.s32.totalorder %s22, 7
      %p47 = por %p45, %p46
      %p48 = scmp.ne.s32.totalorder %s39, %s40
      %p49 = scmp.eq.s32.totalorder %s22, 0
      %p50 = por %p48, %p49
      %p51 = scmp.ne.s32.totalorder %s39, %s40
      %p52 = scmp.eq.s32.totalorder %s23, 7
      %p53 = por %p51, %p52
      %p55 = scmp.ne.s32.totalorder %s40, %s54
      %p56 = scmp.eq.s32.totalorder %s23, 0
      %p57 = por %p55, %p56
      %s59 = sadd.s32 %s58, 1
      %p62 = scmp.eq.s32.totalorder %s17, 7
      %p63 = scmp.ne.s32.totalorder %s58, %s60
      %p64 = scmp.eq.s32.totalorder %s17, 0
      %p65 = por %p63, %p64
      %p66 = scmp.ne.s32.totalorder %s58, %s60
      %p67 = scmp.eq.s32.totalorder %s22, 7
      %p68 = por %p66, %p67
      %p69 = scmp.ne.s32.totalorder %s60, %s61
      %p70 = scmp.eq.s32.totalorder %s22, 0
      %p71 = por %p69, %p70
      %p72 = scmp.ne.s32.totalorder %s60, %s61
      %p73 = scmp.eq.s32.totalorder %s23, 7
      %p74 = por %p72, %p73
      %p76 = scmp.ne.s32.totalorder %s61, %s75
      %p77 = scmp.eq.s32.totalorder %s23, 0
      %p78 = por %p76, %p77
      %s79 = ssub.s32 %s24, %s36
      %s80 = ssub.s32 %s25, %s32
      %s81 = sor.u32 %s79, %s80
      %p82 = scmp.eq.s32.totalorder %s81, 0
      %s84 = sadd.s32 %s83, 1
      %s85 = scalar_select %p82, %s83, %s84
      %p88 = pneg %p82
      %p89 = scmp.eq.s32.totalorder %s17, 7
      %p90 = por %p88, %p89
      %p91 = scmp.ne.s32.totalorder %s83, %s86
      %p92 = scmp.eq.s32.totalorder %s17, 0
      %p93 = por %p91, %p92
      %p94 = scmp.ne.s32.totalorder %s83, %s86
      %p95 = scmp.eq.s32.totalorder %s22, 7
      %p96 = por %p94, %p95
      %p97 = scmp.ne.s32.totalorder %s86, %s87
      %p98 = scmp.eq.s32.totalorder %s22, 0
      %p99 = por %p97, %p98
      %p100 = scmp.ne.s32.totalorder %s86, %s87
      %p101 = scmp.eq.s32.totalorder %s23, 7
      %p102 = por %p100, %p101
      %p104 = scmp.ne.s32.totalorder %s87, %s103
      %p105 = scmp.eq.s32.totalorder %s23, 0
      %p106 = por %p104, %p105
      %s107 = ssub.s32 %s24, %s36
      %s108 = ssub.s32 %s25, %s32
      %s109 = sor.u32 %s107, %s108
      %p110 = scmp.eq.s32.totalorder %s109, 0
      %s112 = sadd.s32 %s111, 1
      %s113 = scalar_select %p110, %s111, %s112
      %p116 = pneg %p110
      %p117 = scmp.eq.s32.totalorder %s17, 7
      %p118 = por %p116, %p117
      %p119 = scmp.ne.s32.totalorder %s111, %s114
      %p120 = scmp.eq.s32.totalorder %s17, 0
      %p121 = por %p119, %p120
      %p122 = scmp.ne.s32.totalorder %s111, %s114
      %p123 = scmp.eq.s32.totalorder %s22, 7
      %p124 = por %p122, %p123
      %p125 = scmp.ne.s32.totalorder %s114, %s115
      %p126 = scmp.eq.s32.totalorder %s22, 0
      %p127 = por %p125, %p126
      %p128 = scmp.ne.s32.totalorder %s114, %s115
      %p129 = scmp.eq.s32.totalorder %s23, 7
      %p130 = por %p128, %p129
      %p132 = scmp.ne.s32.totalorder %s115, %s131
      %p133 = scmp.eq.s32.totalorder %s23, 0
      %p134 = por %p132, %p133
      %p135 = scmp.le.s32.totalorder 1, %s17
      %p136 = scmp.lt.s32.totalorder %s17, 9
      %p137 = pnand %p135, %p136
      %p138 = pneg %p137
      // Predicated region
      $region9: #{tpu_custom_call.1} parent=5 // pred_check
        _
      $region10: #{tpu_custom_call.1} parent=5 // pred_check_branch
        %140 = sbr.rel (%p137) target = $region12
      $region11: #{tpu_custom_call.1} parent=5 // pred_region
        %s141 = ssub.s32 %s17, 1
        // Predicated region
        $region13: #{tpu_custom_call.1} parent=11 // pred_check
          %p142 = pneg %p50
        $region14: #{tpu_custom_call.1} parent=11 // pred_check_branch
          %144 = sbr.rel (%p142) target = $region16
        $region15: #{tpu_custom_call.1} parent=11 // pred_region
          %s146 = ssub.s32 64, 64
          %147 = vsyncadd [#allocation6], %s146
          %150 = dma.hbm_to_smem %s0, 64, [#allocation3], [#allocation6]
        $region16: #{tpu_custom_call.1} parent=11 // pred_fallthru
          _
        // Predicated region
        $region17: #{tpu_custom_call.1} parent=11 // pred_check
          %p151 = pneg %p71
        $region18: #{tpu_custom_call.1} parent=11 // pred_check_branch
          %153 = sbr.rel (%p151) target = $region20
        $region19: #{tpu_custom_call.1} parent=11 // pred_region
          %s155 = ssub.s32 16, 16
          %156 = vsyncadd [#allocation7], %s155
          %s158 = sshll.u32 %s1, 4
          %s159 = int_to_ptr.vmem [resolvable:$true] %s158
          %161 = dma.vmem_to_smem %s159, 16, [#allocation8], [#allocation7]
        $region20: #{tpu_custom_call.1} parent=11 // pred_fallthru
          _
      $region12: #{tpu_custom_call.1} parent=5 // pred_fallthru
        _
      %p162 = scmp.lt.s32.totalorder %s17, 8
      // Predicated region
      $region21: #{tpu_custom_call.1} parent=5 // pred_check
        %p163 = pneg %p162
      $region22: #{tpu_custom_call.1} parent=5 // pred_check_branch
        %165 = sbr.rel (%p163) target = $region24
      $region23: #{tpu_custom_call.1} parent=5 // pred_region
        // Predicated region
        $region25: #{tpu_custom_call.1} parent=23 // pred_check
          %p166 = pneg %p93
        $region26: #{tpu_custom_call.1} parent=23 // pred_check_branch
          %168 = sbr.rel (%p166) target = $region28
        $region27: #{tpu_custom_call.1} parent=23 // pred_region
          %s169 = sand.u32 %s83, 1
          %s170 = scalar_lea.sflag [#allocation4], %s169
          %s171 = sand.u32 %s83, 1
          %s172 = smul.addr %s171, 16
          %s173 = scalar_lea.vmem [#allocation9], %s172
          %s175 = ssub.s32 256, 256
          %176 = vsyncadd %s170, %s175
          %s177 = smul.addr %s25, 2
          %s178 = smul.addr %s24, 8
          %s179 = sadd.s32 %s177, %s178
          %s180 = smul.addr %s179, 128
          %s181 = scalar_lea.hbm %s2, %s180
          %s182 = sshll.u32 %s173, 4
          %s183 = int_to_ptr.vmem [resolvable:$true] %s182
          %188 = dma.hbm_to_vmem [thread:$0]  %s181, 256, %s183, %s170, 128, 128, 8
        $region28: #{tpu_custom_call.1} parent=23 // pred_fallthru
          _
      $region24: #{tpu_custom_call.1} parent=5 // pred_fallthru
        _
      %p189 = scmp.le.s32.totalorder 1, %s17
      %p190 = scmp.lt.s32.totalorder %s17, 9
      %p191 = pnand %p189, %p190
      %p192 = pneg %p191
      // Predicated region
      $region29: #{tpu_custom_call.1} parent=5 // pred_check
        _
      $region30: #{tpu_custom_call.1} parent=5 // pred_check_branch
        %194 = sbr.rel (%p191) target = $region32
      $region31: #{tpu_custom_call.1} parent=5 // pred_region
        %s195 = ssub.s32 %s17, 1
        // Predicated region
        $region33: #{tpu_custom_call.1} parent=31 // pred_check
          %p196 = pneg %p50
        $region34: #{tpu_custom_call.1} parent=31 // pred_check_branch
          %198 = sbr.rel (%p196) target = $region36
        $region35: #{tpu_custom_call.1} parent=31 // pred_region
          %199 = dma.done [#allocation6], 64
        $region36: #{tpu_custom_call.1} parent=31 // pred_fallthru
          _
        // Predicated region
        $region37: #{tpu_custom_call.1} parent=31 // pred_check
          %p200 = pneg %p71
        $region38: #{tpu_custom_call.1} parent=31 // pred_check_branch
          %202 = sbr.rel (%p200) target = $region40
        $region39: #{tpu_custom_call.1} parent=31 // pred_region
          %203 = dma.done [#allocation7], 16
        $region40: #{tpu_custom_call.1} parent=31 // pred_fallthru
          _
        %s204 = sand.u32 %s86, 1
        %s205 = scalar_lea.sflag [#allocation4], %s204
        %s206 = sand.u32 %s86, 1
        %s207 = smul.addr %s206, 16
        %s208 = scalar_lea.vmem [#allocation9], %s207
        // Predicated region
        $region41: #{tpu_custom_call.1} parent=31 // pred_check
          %p209 = pneg %p99
        $region42: #{tpu_custom_call.1} parent=31 // pred_check_branch
          %211 = sbr.rel (%p209) target = $region44
        $region43: #{tpu_custom_call.1} parent=31 // pred_region
          %212 = dma.done %s205, 256
        $region44: #{tpu_custom_call.1} parent=31 // pred_fallthru
          _
        %213 = sfence
        %p214 = pneg %p50
        %p215 = pneg %p47
        %p216 = pneg %p71
        %p217 = pneg %p68
        %s218 = sand.u32 %s86, 1
        %s219 = scalar_lea.sflag [#allocation4], %s218
        %s220 = sand.u32 %s86, 1
        %s221 = smul.addr %s220, 16
        %s222 = scalar_lea.vmem [#allocation9], %s221
        %p223 = pneg %p99
        %p224 = pneg %p96
        %p225 = pneg %p127
        %p226 = pneg %p124
        %s227 = sand.u32 %s114, 1
        %s228 = scalar_lea.sflag [#allocation5], %s227
        %s229 = sand.u32 %s114, 1
        %s230 = smul.addr %s229, 16
        %s231 = scalar_lea.vmem [#allocation10], %s230
        %vm232 = vcmask 162816
        %233 = vst.msk [vmem:[#allocation2] sm:$0xff] %vm232, 0.0
        %234 = vst.msk [vmem:[#allocation2 + $0x8] sm:$0xff] %vm232, 0.0
        %vm235 = vcmask 158720
        %236 = vst.msk [vmem:[#allocation2 + $0x10] sm:$0xf] %vm235, 0.0
        %v237 = vld [vmem:[%s208] sm:$0xff]
        %v238 = vld [vmem:[%s208 + $0x8] sm:$0xff]
        %241 = vrot.lane.b32.xlu0 %v237, 2
        %v242 = vpop.permute.xlu0 %241
        %243 = vrot.lane.b32.xlu0 %v238, 2
        %v244 = vpop.permute.xlu0 %243
        %vm247 = vcmask 146448
        %248 = vst.msk [vmem:[#allocation2 + $0x2] sm:$0xff] %vm247, %v242
        %249 = vst.msk [vmem:[#allocation2 + $0xa] sm:$0xff] %vm247, %v244
        %s250 = sld [smem:[#allocation8 + %s27]]
        %s251 = smul.u32 %s27, 128
        %s252 = sld [smem:[#allocation3 + %s251]]
        %s253 = sadd.s32 %s251, 1
        %s254 = sld [smem:[#allocation3 + %s253]]
        %s255 = sadd.s32 %s251, 2
        %s256 = sld [smem:[#allocation3 + %s255]]
        %s257 = sadd.s32 %s251, 3
        %s258 = sld [smem:[#allocation3 + %s257]]
        %s259 = sadd.s32 %s251, 4
        %s260 = sld [smem:[#allocation3 + %s259]]
        %s261 = sadd.s32 %s251, 5
        %s262 = sld [smem:[#allocation3 + %s261]]
        %s263 = sadd.s32 %s251, 6
        %s264 = sld [smem:[#allocation3 + %s263]]
        %s265 = sadd.s32 %s251, 7
        %s266 = sld [smem:[#allocation3 + %s265]]
        %s267 = sadd.s32 %s251, 8
        %s268 = sld [smem:[#allocation3 + %s267]]
        %s269 = sadd.s32 %s251, 9
        %s270 = sld [smem:[#allocation3 + %s269]]
        %s271 = sadd.s32 %s251, 10
        %s272 = sld [smem:[#allocation3 + %s271]]
        %s273 = sadd.s32 %s251, 11
        %s274 = sld [smem:[#allocation3 + %s273]]
        %s275 = sadd.s32 %s251, 12
        %s276 = sld [smem:[#allocation3 + %s275]]
        %s277 = sadd.s32 %s251, 13
        %s278 = sld [smem:[#allocation3 + %s277]]
        %s279 = sadd.s32 %s251, 14
        %s280 = sld [smem:[#allocation3 + %s279]]
        %s281 = sadd.s32 %s251, 15
        %s282 = sld [smem:[#allocation3 + %s281]]
        %s283 = sadd.s32 %s251, 16
        %s284 = sld [smem:[#allocation3 + %s283]]
        %s285 = sadd.s32 %s251, 17
        %s286 = sld [smem:[#allocation3 + %s285]]
        %s287 = sadd.s32 %s251, 18
        %s288 = sld [smem:[#allocation3 + %s287]]
        %s289 = sadd.s32 %s251, 19
        %s290 = sld [smem:[#allocation3 + %s289]]
        %s291 = sadd.s32 %s251, 20
        %s292 = sld [smem:[#allocation3 + %s291]]
        %s293 = sadd.s32 %s251, 21
        %s294 = sld [smem:[#allocation3 + %s293]]
        %s295 = sadd.s32 %s251, 22
        %s296 = sld [smem:[#allocation3 + %s295]]
        %s297 = sadd.s32 %s251, 23
        %s298 = sld [smem:[#allocation3 + %s297]]
        %s299 = sadd.s32 %s251, 24
        %s300 = sld [smem:[#allocation3 + %s299]]
        %v301 = vstv %s250
        %v302 = vld [vmem:[#allocation2] sm:$0xff]
        %v303 = vld [vmem:[#allocation2 + $0x8] sm:$0xff]
        %v304 = vstv %s252
        %v305 = vmul.f32 %v302, %v304
        %v306 = vmul.f32 %v303, %v304
        %v307 = vadd.f32 %v301, %v305
        %v308 = vadd.f32 %v301, %v306
        %v309 = vstv %s254
        %v310 = vmul.f32 %v302, %v309
        %v311 = vmul.f32 %v303, %v309
        %314 = vrot.lane.b32.xlu0 %v310, 127
        %v315 = vpop.permute.xlu0 %314
        %316 = vrot.lane.b32.xlu0 %v311, 127
        %v317 = vpop.permute.xlu0 %316
        %v320 = vadd.f32 %v307, %v315
        %v321 = vadd.f32 %v308, %v317
        %v322 = vstv %s256
        %v323 = vmul.f32 %v302, %v322
        %v324 = vmul.f32 %v303, %v322
        %327 = vrot.lane.b32.xlu0 %v323, 126
        %v328 = vpop.permute.xlu0 %327
        %329 = vrot.lane.b32.xlu0 %v324, 126
        %v330 = vpop.permute.xlu0 %329
        %v333 = vadd.f32 %v320, %v328
        %v334 = vadd.f32 %v321, %v330
        %v335 = vstv %s258
        %v336 = vmul.f32 %v302, %v335
        %v337 = vmul.f32 %v303, %v335
        %340 = vrot.lane.b32.xlu0 %v336, 125
        %v341 = vpop.permute.xlu0 %340
        %342 = vrot.lane.b32.xlu0 %v337, 125
        %v343 = vpop.permute.xlu0 %342
        %v346 = vadd.f32 %v333, %v341
        %v347 = vadd.f32 %v334, %v343
        %v348 = vstv %s260
        %v349 = vmul.f32 %v302, %v348
        %v350 = vmul.f32 %v303, %v348
        %353 = vrot.lane.b32.xlu0 %v349, 124
        %v354 = vpop.permute.xlu0 %353
        %355 = vrot.lane.b32.xlu0 %v350, 124
        %v356 = vpop.permute.xlu0 %355
        %v359 = vadd.f32 %v346, %v354
        %v360 = vadd.f32 %v347, %v356
        %s361 = sadd.s32 0, 1
        %s362 = scalar_lea.vmem [#allocation2], %s361
        %v363 = vld [vmem:[%s362] sm:$0xff]
        %v364 = vld [vmem:[%s362 + $0x8] sm:$0xff]
        %v365 = vstv %s262
        %v366 = vmul.f32 %v363, %v365
        %v367 = vmul.f32 %v364, %v365
        %v368 = vadd.f32 %v359, %v366
        %v369 = vadd.f32 %v360, %v367
        %v370 = vstv %s264
        %v371 = vmul.f32 %v363, %v370
        %v372 = vmul.f32 %v364, %v370
        %375 = vrot.lane.b32.xlu0 %v371, 127
        %v376 = vpop.permute.xlu0 %375
        %377 = vrot.lane.b32.xlu0 %v372, 127
        %v378 = vpop.permute.xlu0 %377
        %v381 = vadd.f32 %v368, %v376
        %v382 = vadd.f32 %v369, %v378
        %v383 = vstv %s266
        %v384 = vmul.f32 %v363, %v383
        %v385 = vmul.f32 %v364, %v383
        %388 = vrot.lane.b32.xlu0 %v384, 126
        %v389 = vpop.permute.xlu0 %388
        %390 = vrot.lane.b32.xlu0 %v385, 126
        %v391 = vpop.permute.xlu0 %390
        %v394 = vadd.f32 %v381, %v389
        %v395 = vadd.f32 %v382, %v391
        %v396 = vstv %s268
        %v397 = vmul.f32 %v363, %v396
        %v398 = vmul.f32 %v364, %v396
        %401 = vrot.lane.b32.xlu0 %v397, 125
        %v402 = vpop.permute.xlu0 %401
        %403 = vrot.lane.b32.xlu0 %v398, 125
        %v404 = vpop.permute.xlu0 %403
        %v407 = vadd.f32 %v394, %v402
        %v408 = vadd.f32 %v395, %v404
        %v409 = vstv %s270
        %v410 = vmul.f32 %v363, %v409
        %v411 = vmul.f32 %v364, %v409
        %414 = vrot.lane.b32.xlu0 %v410, 124
        %v415 = vpop.permute.xlu0 %414
        %416 = vrot.lane.b32.xlu0 %v411, 124
        %v417 = vpop.permute.xlu0 %416
        %v420 = vadd.f32 %v407, %v415
        %v421 = vadd.f32 %v408, %v417
        %s422 = sadd.s32 0, 2
        %s423 = scalar_lea.vmem [#allocation2], %s422
        %v424 = vld [vmem:[%s423] sm:$0xff]
        %v425 = vld [vmem:[%s423 + $0x8] sm:$0xff]
        %v426 = vstv %s272
        %v427 = vmul.f32 %v424, %v426
        %v428 = vmul.f32 %v425, %v426
        %v429 = vadd.f32 %v420, %v427
        %v430 = vadd.f32 %v421, %v428
        %v431 = vstv %s274
        %v432 = vmul.f32 %v424, %v431
        %v433 = vmul.f32 %v425, %v431
        %436 = vrot.lane.b32.xlu0 %v432, 127
        %v437 = vpop.permute.xlu0 %436
        %438 = vrot.lane.b32.xlu0 %v433, 127
        %v439 = vpop.permute.xlu0 %438
        %v442 = vadd.f32 %v429, %v437
        %v443 = vadd.f32 %v430, %v439
        %v444 = vstv %s276
        %v445 = vmul.f32 %v424, %v444
        %v446 = vmul.f32 %v425, %v444
        %449 = vrot.lane.b32.xlu0 %v445, 126
        %v450 = vpop.permute.xlu0 %449
        %451 = vrot.lane.b32.xlu0 %v446, 126
        %v452 = vpop.permute.xlu0 %451
        %v455 = vadd.f32 %v442, %v450
        %v456 = vadd.f32 %v443, %v452
        %v457 = vstv %s278
        %v458 = vmul.f32 %v424, %v457
        %v459 = vmul.f32 %v425, %v457
        %462 = vrot.lane.b32.xlu0 %v458, 125
        %v463 = vpop.permute.xlu0 %462
        %464 = vrot.lane.b32.xlu0 %v459, 125
        %v465 = vpop.permute.xlu0 %464
        %v468 = vadd.f32 %v455, %v463
        %v469 = vadd.f32 %v456, %v465
        %v470 = vstv %s280
        %v471 = vmul.f32 %v424, %v470
        %v472 = vmul.f32 %v425, %v470
        %475 = vrot.lane.b32.xlu0 %v471, 124
        %v476 = vpop.permute.xlu0 %475
        %477 = vrot.lane.b32.xlu0 %v472, 124
        %v478 = vpop.permute.xlu0 %477
        %v481 = vadd.f32 %v468, %v476
        %v482 = vadd.f32 %v469, %v478
        %s483 = sadd.s32 0, 3
        %s484 = scalar_lea.vmem [#allocation2], %s483
        %v485 = vld [vmem:[%s484] sm:$0xff]
        %v486 = vld [vmem:[%s484 + $0x8] sm:$0xff]
        %v487 = vstv %s282
        %v488 = vmul.f32 %v485, %v487
        %v489 = vmul.f32 %v486, %v487
        %v490 = vadd.f32 %v481, %v488
        %v491 = vadd.f32 %v482, %v489
        %v492 = vstv %s284
        %v493 = vmul.f32 %v485, %v492
        %v494 = vmul.f32 %v486, %v492
        %497 = vrot.lane.b32.xlu0 %v493, 127
        %v498 = vpop.permute.xlu0 %497
        %499 = vrot.lane.b32.xlu0 %v494, 127
        %v500 = vpop.permute.xlu0 %499
        %v503 = vadd.f32 %v490, %v498
        %v504 = vadd.f32 %v491, %v500
        %v505 = vstv %s286
        %v506 = vmul.f32 %v485, %v505
        %v507 = vmul.f32 %v486, %v505
        %510 = vrot.lane.b32.xlu0 %v506, 126
        %v511 = vpop.permute.xlu0 %510
        %512 = vrot.lane.b32.xlu0 %v507, 126
        %v513 = vpop.permute.xlu0 %512
        %v516 = vadd.f32 %v503, %v511
        %v517 = vadd.f32 %v504, %v513
        %v518 = vstv %s288
        %v519 = vmul.f32 %v485, %v518
        %v520 = vmul.f32 %v486, %v518
        %523 = vrot.lane.b32.xlu0 %v519, 125
        %v524 = vpop.permute.xlu0 %523
        %525 = vrot.lane.b32.xlu0 %v520, 125
        %v526 = vpop.permute.xlu0 %525
        %v529 = vadd.f32 %v516, %v524
        %v530 = vadd.f32 %v517, %v526
        %v531 = vstv %s290
        %v532 = vmul.f32 %v485, %v531
        %v533 = vmul.f32 %v486, %v531
        %536 = vrot.lane.b32.xlu0 %v532, 124
        %v537 = vpop.permute.xlu0 %536
        %538 = vrot.lane.b32.xlu0 %v533, 124
        %v539 = vpop.permute.xlu0 %538
        %v542 = vadd.f32 %v529, %v537
        %v543 = vadd.f32 %v530, %v539
        %s544 = sadd.s32 0, 4
        %s545 = scalar_lea.vmem [#allocation2], %s544
        %v546 = vld [vmem:[%s545] sm:$0xff]
        %v547 = vld [vmem:[%s545 + $0x8] sm:$0xff]
        %v548 = vstv %s292
        %v549 = vmul.f32 %v546, %v548
        %v550 = vmul.f32 %v547, %v548
        %v551 = vadd.f32 %v542, %v549
        %v552 = vadd.f32 %v543, %v550
        %v553 = vstv %s294
        %v554 = vmul.f32 %v546, %v553
        %v555 = vmul.f32 %v547, %v553
        %558 = vrot.lane.b32.xlu0 %v554, 127
        %v559 = vpop.permute.xlu0 %558
        %560 = vrot.lane.b32.xlu0 %v555, 127
        %v561 = vpop.permute.xlu0 %560
        %v564 = vadd.f32 %v551, %v559
        %v565 = vadd.f32 %v552, %v561
        %v566 = vstv %s296
        %v567 = vmul.f32 %v546, %v566
        %v568 = vmul.f32 %v547, %v566
        %571 = vrot.lane.b32.xlu0 %v567, 126
        %v572 = vpop.permute.xlu0 %571
        %573 = vrot.lane.b32.xlu0 %v568, 126
        %v574 = vpop.permute.xlu0 %573
        %v577 = vadd.f32 %v564, %v572
        %v578 = vadd.f32 %v565, %v574
        %v579 = vstv %s298
        %v580 = vmul.f32 %v546, %v579
        %v581 = vmul.f32 %v547, %v579
        %584 = vrot.lane.b32.xlu0 %v580, 125
        %v585 = vpop.permute.xlu0 %584
        %586 = vrot.lane.b32.xlu0 %v581, 125
        %v587 = vpop.permute.xlu0 %586
        %v590 = vadd.f32 %v577, %v585
        %v591 = vadd.f32 %v578, %v587
        %v592 = vstv %s300
        %v593 = vmul.f32 %v546, %v592
        %v594 = vmul.f32 %v547, %v592
        %597 = vrot.lane.b32.xlu0 %v593, 124
        %v598 = vpop.permute.xlu0 %597
        %599 = vrot.lane.b32.xlu0 %v594, 124
        %v600 = vpop.permute.xlu0 %599
        %v603 = vadd.f32 %v590, %v598
        %v604 = vadd.f32 %v591, %v600
        %vm605 = vcmask 130048
        %606 = vst.msk [vmem:[%s231] sm:$0xff] %vm605, %v603
        %607 = vst.msk [vmem:[%s231 + $0x8] sm:$0xff] %vm605, %v604
        %s608 = sand.u32 %s114, 1
        %s609 = scalar_lea.sflag [#allocation5], %s608
        %s610 = sand.u32 %s114, 1
        %s611 = smul.addr %s610, 16
        %s612 = scalar_lea.vmem [#allocation10], %s611
        // Predicated region
        $region45: #{tpu_custom_call.1} parent=31 // pred_check
          %p613 = pneg %p124
        $region46: #{tpu_custom_call.1} parent=31 // pred_check_branch
          %615 = sbr.rel (%p613) target = $region48
        $region47: #{tpu_custom_call.1} parent=31 // pred_region
          %s617 = ssub.s32 256, 256
          %618 = vsyncadd %s609, %s617
          %s619 = smul.addr %s27, 2
          %s620 = smul.addr %s26, 8
          %s621 = sadd.s32 %s619, %s620
          %s622 = smul.addr %s621, 128
          %s623 = scalar_lea.hbm %s3, %s622
          %s624 = sshll.u32 %s612, 4
          %s625 = int_to_ptr.vmem [resolvable:$true] %s624
          %630 = dma.vmem_to_hbm [thread:$0]  %s625, 256, %s623, %s609, 128, 128, 8
        $region48: #{tpu_custom_call.1} parent=31 // pred_fallthru
          _
      $region32: #{tpu_custom_call.1} parent=5 // pred_fallthru
        _
      %p631 = scmp.le.s32.totalorder 2, %s17
      // Predicated region
      $region49: #{tpu_custom_call.1} parent=5 // pred_check
        %p632 = pneg %p631
      $region50: #{tpu_custom_call.1} parent=5 // pred_check_branch
        %634 = sbr.rel (%p632) target = $region52
      $region51: #{tpu_custom_call.1} parent=5 // pred_region
        %s635 = ssub.s32 %s17, 2
        // Predicated region
        $region53: #{tpu_custom_call.1} parent=51 // pred_check
          %p636 = pneg %p130
        $region54: #{tpu_custom_call.1} parent=51 // pred_check_branch
          %638 = sbr.rel (%p636) target = $region56
        $region55: #{tpu_custom_call.1} parent=51 // pred_region
          %s639 = sand.u32 %s115, 1
          %s640 = scalar_lea.sflag [#allocation5], %s639
          %s641 = sand.u32 %s115, 1
          %s642 = smul.addr %s641, 16
          %s643 = scalar_lea.vmem [#allocation10], %s642
          %644 = dma.done %s640, 256
        $region56: #{tpu_custom_call.1} parent=51 // pred_fallthru
          _
      $region52: #{tpu_custom_call.1} parent=5 // pred_fallthru
        _
    $region6: #{tpu_custom_call.1} parent=1 // loop_footer
      %s21 = sadd.s32 1, %s17
    $region7: #{tpu_custom_call.1} parent=1 // loop_footer_branch
      %16 = sbr.rel target = $region3
    $region8: #{tpu_custom_call.1} parent=1 // loop_exit
      _
    %645 = vsyncpa [#allocation4], 1
    %s646 = scalar_lea.sflag [#allocation4], 1
    %647 = vsyncpa %s646, 1
    %648 = vsyncpa [#allocation5], 1
    %s649 = scalar_lea.sflag [#allocation5], 1
    %650 = vsyncpa %s649, 1
    %651 = vsyncpa [#allocation6], 1
    %s652 = scalar_lea.sflag [#allocation6], 1
    %653 = vsyncpa %s652, 1
    %654 = vsyncpa [#allocation7], 1
    %s655 = scalar_lea.sflag [#allocation7], 1
    %656 = vsyncpa %s655, 1

</llo_original>
